<compile_context>
chip_gen: v7x
topology: tpu7x:2x2x1
jax: 0.10.0
libtpu: 0.0.40
codegen_flags: <defaults>
</compile_context>

<pallas_src>
import functools

import numpy as np
import jax
import jax.numpy as jnp
from jax import lax
from jax.experimental import pallas as pl
from jax.experimental.pallas import tpu as pltpu


_NEG_INF = -1e30
_VMEM_LIMIT = 32 * 1024 * 1024   # explicit scoped-VMEM budget (safe on v5e/v6e/v7x)


# ----------------------------------------------------------------------------
# Tiled linear projection:  y = x @ w + b   (bf16 operands, f32 accumulation)
# ----------------------------------------------------------------------------

def _linear_kernel(x_ref, w_ref, b_ref, o_ref, acc_ref):
    k_i = pl.program_id(2)

    @pl.when(k_i == 0)
    def _init():
        acc_ref[...] = jnp.zeros(acc_ref.shape, acc_ref.dtype)

    acc_ref[...] += jnp.dot(x_ref[...], w_ref[...],
                            preferred_element_type=jnp.float32)

    @pl.when(k_i == pl.num_programs(2) - 1)
    def _finalize():
        o_ref[...] = (acc_ref[...] + b_ref[...].astype(jnp.float32)
                      ).astype(o_ref.dtype)


def _pick_tile(dim, target):
    # Use `target` if it divides the dim (keeps (8,128)-aligned tiles), otherwise
    # fall back to the full extent (a full-extent block is always legal).
    return target if dim % target == 0 else dim


def linear_pallas(x, w, b, out_dtype):
    """x: (M, K) bf16, w: (K, N) bf16, b: (1, N) f32 -> (M, N) out_dtype."""
    M, K = x.shape
    N = w.shape[1]
    tm = _pick_tile(M, 256)
    tn = _pick_tile(N, 256)
    tk = _pick_tile(K, 256)
    return pl.pallas_call(
        _linear_kernel,
        out_shape=jax.ShapeDtypeStruct((M, N), out_dtype),
        grid=(M // tm, N // tn, K // tk),
        in_specs=[
            pl.BlockSpec((tm, tk), lambda i, j, k: (i, k)),
            pl.BlockSpec((tk, tn), lambda i, j, k: (k, j)),
            pl.BlockSpec((1, tn), lambda i, j, k: (0, j)),
        ],
        out_specs=pl.BlockSpec((tm, tn), lambda i, j, k: (i, j)),
        scratch_shapes=[pltpu.VMEM((tm, tn), jnp.float32)],
        compiler_params=pltpu.CompilerParams(
            dimension_semantics=("parallel", "parallel", "arbitrary"),
            vmem_limit_bytes=_VMEM_LIMIT),
    )(x, w, b)


# ----------------------------------------------------------------------------
# Fused RoPE + cross-attention kernel (all heads per batch, online softmax)
# ----------------------------------------------------------------------------

def _cross_attn_kernel(q_ref, k_ref, v_ref, cos_ref, sin_ref, o_ref,
                       q_rope_ref, m_ref, l_ref, acc_ref,
                       *, scale, num_heads, head_dim):
    kv_i = pl.program_id(1)
    H, D = num_heads, head_dim
    S1, HD = q_rope_ref.shape

    @pl.when(kv_i == 0)
    def _init():
        # RoPE on q (f32 elementwise math), then the .half() emulation (bf16).
        qf = q_ref[0].astype(jnp.float32)                 # (S1, HD)
        # rotate_half via XLU lane rotations: rot[2j] = -q[2j+1], rot[2j+1] = q[2j]
        # (pairs never cross a head boundary since head_dim is even).
        q_prev = pltpu.roll(qf, shift=1, axis=1)          # q_prev[p] = qf[p-1]
        q_next = pltpu.roll(qf, shift=HD - 1, axis=1)     # q_next[p] = qf[p+1]
        lane = lax.broadcasted_iota(jnp.int32, (S1, HD), 1)
        rot = jnp.where(lane % 2 == 0, -q_next, q_prev)
        q_rope = qf * cos_ref[...] + rot * sin_ref[...]
        q_rope_ref[...] = q_rope.astype(jnp.bfloat16)

        m_ref[...] = jnp.full(m_ref.shape, _NEG_INF, dtype=m_ref.dtype)
        l_ref[...] = jnp.zeros(l_ref.shape, l_ref.dtype)
        acc_ref[...] = jnp.zeros(acc_ref.shape, acc_ref.dtype)

    q = q_rope_ref[...]            # (S1, HD) bf16 (resident across KV steps)
    k = k_ref[0]                   # (KT, HD) bf16
    v = v_ref[0]                   # (KT, HD) bf16

    # Online softmax, one head (lane slice of width D) at a time.  H is small and
    # static so the Python loop fully unrolls; for production head_dim (64 / 128)
    # every slice is lane-aligned, i.e. unmasked vector ops.
    for h in range(H):
        sl = slice(h * D, (h + 1) * D)
        s = lax.dot_general(q[:, sl], k[:, sl], (((1,), (1,)), ((), ())),
                            preferred_element_type=jnp.float32) * scale   # (S1, KT)
        m_prev = m_ref[:, h:h + 1]
        m_new = jnp.maximum(m_prev, jnp.max(s, axis=-1, keepdims=True))
        alpha = jnp.exp(m_prev - m_new)
        p = jnp.exp(s - m_new)
        l_ref[:, h:h + 1] = alpha * l_ref[:, h:h + 1] + jnp.sum(
            p, axis=-1, keepdims=True)
        acc_ref[:, sl] = alpha * acc_ref[:, sl] + jnp.dot(
            p.astype(jnp.bfloat16), v[:, sl], preferred_element_type=jnp.float32)
        m_ref[:, h:h + 1] = m_new

    @pl.when(kv_i == pl.num_programs(1) - 1)
    def _finalize():
        for h in range(H):
            sl = slice(h * D, (h + 1) * D)
            inv_l = pl.reciprocal(l_ref[:, h:h + 1], approx=True)   # EUP, not VPU div
            acc_ref[:, sl] = acc_ref[:, sl] * inv_l
        o_ref[0] = acc_ref[...].astype(o_ref.dtype)    # single lane-dense store


def cross_attention_pallas(q, k, v, cos, sin, scale, num_heads, head_dim):
    """q: (B, S1, HD) bf16, k/v: (B, S2, HD) bf16, cos/sin: (S1, HD) f32."""
    B, S1, HD = q.shape
    S2 = k.shape[1]
    KT = _pick_tile(S2, 512)       # KV tile size for the online-softmax axis
    kern = functools.partial(_cross_attn_kernel, scale=scale,
                             num_heads=num_heads, head_dim=head_dim)
    return pl.pallas_call(
        kern,
        out_shape=jax.ShapeDtypeStruct((B, S1, HD), jnp.bfloat16),
        grid=(B, S2 // KT),
        in_specs=[
            pl.BlockSpec((1, S1, HD), lambda b, kv: (b, 0, 0)),
            pl.BlockSpec((1, KT, HD), lambda b, kv: (b, kv, 0)),
            pl.BlockSpec((1, KT, HD), lambda b, kv: (b, kv, 0)),
            pl.BlockSpec((S1, HD), lambda b, kv: (0, 0)),
            pl.BlockSpec((S1, HD), lambda b, kv: (0, 0)),
        ],
        out_specs=pl.BlockSpec((1, S1, HD), lambda b, kv: (b, 0, 0)),
        scratch_shapes=[
            pltpu.VMEM((S1, HD), jnp.bfloat16),          # RoPE'd q
            pltpu.VMEM((S1, num_heads), jnp.float32),    # running max  m
            pltpu.VMEM((S1, num_heads), jnp.float32),    # running sum  l
            pltpu.VMEM((S1, HD), jnp.float32),           # accumulator
        ],
        compiler_params=pltpu.CompilerParams(
            dimension_semantics=("parallel", "arbitrary"),
            vmem_limit_bytes=_VMEM_LIMIT),
    )(q, k, v, cos, sin)


# ----------------------------------------------------------------------------
# Module wrapper
# ----------------------------------------------------------------------------

class FlashCrossMHAModifiedPallas:
    def __init__(self, qdim, kdim, num_heads, key):
        assert qdim % num_heads == 0
        self.qdim = qdim
        self.kdim = kdim
        self.num_heads = num_heads
        self.head_dim = qdim // num_heads
        assert self.head_dim % 8 == 0 and self.head_dim <= 128
        self.scale = float(self.head_dim) ** (-0.5)

        k1, k2, k3, k4, k5, k6 = jax.random.split(key, 6)
        s = 0.02
        # Weights stored (in, out) and pre-cast to bf16 (MXU-native; the module
        # already emulates fp16).  Biases stay f32, added into the f32 accumulator.
        self.wq = (jax.random.normal(k1, (qdim, qdim), jnp.float32) * s).astype(jnp.bfloat16)
        self.bq = jax.random.normal(k2, (1, qdim), jnp.float32) * s
        # kv weights laid out [Wk | Wv] -> the K/V split is a contiguous slice.
        self.wkv = (jax.random.normal(k3, (kdim, 2 * qdim), jnp.float32) * s).astype(jnp.bfloat16)
        self.bkv = jax.random.normal(k4, (1, 2 * qdim), jnp.float32) * s
        self.wo = (jax.random.normal(k5, (qdim, qdim), jnp.float32) * s).astype(jnp.bfloat16)
        self.bo = jax.random.normal(k6, (1, qdim), jnp.float32) * s
        # TODO(synk): qk_norm=True (LayerNorm over head_dim) and dropout>0 paths are
        # Identity at the module's default config and are not implemented.

    def __call__(self, x, y, freqs_cis_img=None):
        b, s1, _ = x.shape
        _, s2, _ = y.shape
        H, D, HD = self.num_heads, self.head_dim, self.qdim

        xb = x.astype(jnp.bfloat16).reshape(b * s1, HD)
        yb = y.astype(jnp.bfloat16).reshape(b * s2, self.kdim)

        # Projections (tiled Pallas matmuls); bf16 output == .half() emulation.
        q = linear_pallas(xb, self.wq, self.bq, jnp.bfloat16).reshape(b, s1, HD)
        kv = linear_pallas(yb, self.wkv, self.bkv, jnp.bfloat16).reshape(b, s2, 2 * HD)
        k = kv[:, :, :HD]            # contiguous slices -> no gather / relayout
        v = kv[:, :, HD:]

        if freqs_cis_img is None:
            cos = jnp.ones((s1, HD), jnp.float32)
            sin = jnp.zeros((s1, HD), jnp.float32)
        else:
            c, sn = freqs_cis_img                            # each (S1, head_dim)
            cos = jnp.tile(c.astype(jnp.float32), (1, H))    # -> (S1, H*D) per-head copy
            sin = jnp.tile(sn.astype(jnp.float32), (1, H))

        ctx = cross_attention_pallas(q, k, v, cos, sin, self.scale, H, D)  # (b,s1,HD) bf16

        out = linear_pallas(ctx.reshape(b * s1, HD), self.wo, self.bo, jnp.float32)
        return (out.reshape(b, s1, HD),)


# ----------------------------------------------------------------------------
# Pure-JAX reference (same math / same bf16 rounding points, no Pallas)
# ----------------------------------------------------------------------------

def reference_forward(mod, x, y, freqs_cis_img):
    b, s1, _ = x.shape
    _, s2, _ = y.shape
    H, D, HD = mod.num_heads, mod.head_dim, mod.qdim

    xb = x.astype(jnp.bfloat16).reshape(b * s1, HD)
    yb = y.astype(jnp.bfloat16).reshape(b * s2, mod.kdim)
    q = (jnp.dot(xb, mod.wq, preferred_element_type=jnp.float32) + mod.bq
         ).astype(jnp.bfloat16)
    kv = (jnp.dot(yb, mod.wkv, preferred_element_type=jnp.float32) + mod.bkv
          ).astype(jnp.bfloat16)
    q = q.reshape(b, s1, H, D).astype(jnp.float32)
    kv = kv.reshape(b, s2, 2, H, D).astype(jnp.float32)
    k, v = kv[:, :, 0], kv[:, :, 1]

    cos, sin = freqs_cis_img
    cos = cos.astype(jnp.float32)[None, :, None, :]
    sin = sin.astype(jnp.float32)[None, :, None, :]
    qr = q.reshape(b, s1, H, D // 2, 2)
    rot = jnp.stack([-qr[..., 1], qr[..., 0]], axis=-1).reshape(b, s1, H, D)
    q = (q * cos + rot * sin).astype(jnp.bfloat16).astype(jnp.float32)

    s = jnp.einsum('bqhd,bkhd->bhqk', q, k) * mod.scale
    m = jnp.max(s, axis=-1, keepdims=True)
    p = jnp.exp(s - m)
    l = jnp.sum(p, axis=-1, keepdims=True)
    p_bf = p.astype(jnp.bfloat16).astype(jnp.float32)
    ctx = jnp.einsum('bhqk,bkhd->bqhd', p_bf, v)
    ctx = ctx / jnp.transpose(l, (0, 2, 1, 3))               # (b, s1, H, 1)
    ctx = ctx.astype(jnp.bfloat16).reshape(b * s1, HD)
    out = jnp.dot(ctx, mod.wo, preferred_element_type=jnp.float32) + mod.bo
    return out.reshape(b, s1, HD)


# ----------------------------------------------------------------------------
# Main
# ----------------------------------------------------------------------------

if __name__ == "__main__":
    key = jax.random.PRNGKey(0)
    kx, ky, kmod = jax.random.split(key, 3)

    B, S1, S2 = 2, 8, 16
    QDIM, KDIM, NUM_HEADS = 32, 24, 4
    D = QDIM // NUM_HEADS

    x = jax.random.normal(kx, (B, S1, QDIM), jnp.float32)
    y = jax.random.normal(ky, (B, S2, KDIM), jnp.float32)

    # RoPE tables (cos, sin), each (S1, head_dim), frequencies repeated in pairs.
    pos = np.arange(S1, dtype=np.float32)
    inv_freq = 1.0 / (10000.0 ** (np.arange(0, D, 2, dtype=np.float32) / D))
    inv_freq = np.repeat(inv_freq, 2)
    ang = pos[:, None] * inv_freq[None, :]
    freqs_cis_img = (jnp.asarray(np.cos(ang)), jnp.asarray(np.sin(ang)))

    mod = FlashCrossMHAModifiedPallas(QDIM, KDIM, NUM_HEADS, kmod)

    out_tuple = mod(x, y, freqs_cis_img)
    jax.block_until_ready(out_tuple)
    out = np.asarray(out_tuple[0])

    ref = np.asarray(reference_forward(mod, x, y, freqs_cis_img))
    np.testing.assert_allclose(out, ref, rtol=3e-2, atol=3e-2)

    print("KERNEL_OK")
</pallas_src>

<mosaic_0001>
module attributes {stable_mosaic.version = 11 : i64} {
  func.func @_linear_kernel(%arg0: i32, %arg1: i32, %arg2: i32, %arg3: memref<16x32xbf16, #tpu.memory_space<vmem>>, %arg4: memref<32x32xbf16, #tpu.memory_space<vmem>>, %arg5: memref<1x32xf32, #tpu.memory_space<vmem>>, %arg6: memref<16x32xbf16, #tpu.memory_space<vmem>>, %arg7: memref<16x32xf32, #tpu.memory_space<vmem>>) attributes {dimension_semantics = [#tpu.dimension_semantics<parallel>, #tpu.dimension_semantics<parallel>, #tpu.dimension_semantics<arbitrary>], iteration_bounds = array<i64: 1, 1, 1>, scalar_prefetch = 0 : i64, scratch_operands = 1 : i64, tpu.core_type = #tpu.core_type<tc>, window_params = [{transform_indices = @transform_0, window_bounds = array<i64: 16, 32>}, {transform_indices = @transform_1, window_bounds = array<i64: 32, 32>}, {transform_indices = @transform_2, window_bounds = array<i64: 1, 32>}, {transform_indices = @transform_3, window_bounds = array<i64: 16, 32>}]} {
    %c0_i32 = arith.constant 0 : i32
    %0 = arith.cmpi eq, %arg2, %c0_i32 : i32
    %1 = arith.extui %0 : i1 to i32
    %c0_i32_0 = arith.constant 0 : i32
    %2 = arith.cmpi ne, %1, %c0_i32_0 : i32
    scf.if %2 {
      %cst_10 = arith.constant 0.000000e+00 : f32
      %12 = vector.broadcast %cst_10 : f32 to vector<16x32xf32>
      %c0_11 = arith.constant 0 : index
      %c0_12 = arith.constant 0 : index
      %13 = vector.load %arg7[%c0_11, %c0_12] : memref<16x32xf32, #tpu.memory_space<vmem>>, vector<16x32xf32>
      tpu.vector_store %arg7[%c0_11, %c0_12], %12 {strides = array<i32>} : memref<16x32xf32, #tpu.memory_space<vmem>>, vector<16x32xf32>,
    } else {
    }
    %c0 = arith.constant 0 : index
    %c0_1 = arith.constant 0 : index
    %3 = vector.load %arg7[%c0, %c0_1] : memref<16x32xf32, #tpu.memory_space<vmem>>, vector<16x32xf32>
    %c0_2 = arith.constant 0 : index
    %c0_3 = arith.constant 0 : index
    %4 = vector.load %arg3[%c0_2, %c0_3] : memref<16x32xbf16, #tpu.memory_space<vmem>>, vector<16x32xbf16>
    %c0_4 = arith.constant 0 : index
    %c0_5 = arith.constant 0 : index
    %5 = vector.load %arg4[%c0_4, %c0_5] : memref<32x32xbf16, #tpu.memory_space<vmem>>, vector<32x32xbf16>
    %cst = arith.constant dense<0.000000e+00> : vector<16x32xf32>
    %6 = tpu.matmul %4, %5, %cst {dimension_numbers = #tpu.dot_dimension_numbers<[1], [0], [0], [1], [0, 0, 1, 1], [], []>} : vector<16x32xbf16>, vector<32x32xbf16>, vector<16x32xf32> -> vector<16x32xf32>
    %7 = arith.addf %3, %6 : vector<16x32xf32>
    %c0_6 = arith.constant 0 : index
    %c0_7 = arith.constant 0 : index
    %8 = vector.load %arg7[%c0_6, %c0_7] : memref<16x32xf32, #tpu.memory_space<vmem>>, vector<16x32xf32>
    tpu.vector_store %arg7[%c0_6, %c0_7], %7 {strides = array<i32>} : memref<16x32xf32, #tpu.memory_space<vmem>>, vector<16x32xf32>,
    %c0_i32_8 = arith.constant 0 : i32
    %9 = arith.cmpi eq, %arg2, %c0_i32_8 : i32
    %10 = arith.extui %9 : i1 to i32
    %c0_i32_9 = arith.constant 0 : i32
    %11 = arith.cmpi ne, %10, %c0_i32_9 : i32
    scf.if %11 {
      %c0_10 = arith.constant 0 : index
      %c0_11 = arith.constant 0 : index
      %12 = vector.load %arg7[%c0_10, %c0_11] : memref<16x32xf32, #tpu.memory_space<vmem>>, vector<16x32xf32>
      %c0_12 = arith.constant 0 : index
      %c0_13 = arith.constant 0 : index
      %13 = vector.load %arg5[%c0_12, %c0_13] : memref<1x32xf32, #tpu.memory_space<vmem>>, vector<1x32xf32>
      %14 = vector.broadcast %13 : vector<1x32xf32> to vector<16x32xf32>
      %15 = arith.addf %12, %14 : vector<16x32xf32>
      %16 = arith.truncf %15 : vector<16x32xf32> to vector<16x32xbf16>
      %c0_14 = arith.constant 0 : index
      %c0_15 = arith.constant 0 : index
      %17 = vector.load %arg6[%c0_14, %c0_15] : memref<16x32xbf16, #tpu.memory_space<vmem>>, vector<16x32xbf16>
      tpu.vector_store %arg6[%c0_14, %c0_15], %16 {strides = array<i32>} : memref<16x32xbf16, #tpu.memory_space<vmem>>, vector<16x32xbf16>,
    } else {
    }
    return
  }
  func.func @transform_0(%arg0: i32, %arg1: i32, %arg2: i32) -> (i32, i32) {
    %c0_i32 = arith.constant 0 : i32
    return %arg0, %arg2 : i32, i32
  }
  func.func @transform_1(%arg0: i32, %arg1: i32, %arg2: i32) -> (i32, i32) {
    %c0_i32 = arith.constant 0 : i32
    return %arg2, %arg1 : i32, i32
  }
  func.func @transform_2(%arg0: i32, %arg1: i32, %arg2: i32) -> (i32, i32) {
    %c0_i32 = arith.constant 0 : i32
    %c0_i32_0 = arith.constant 0 : i32
    return %c0_i32, %arg1 : i32, i32
  }
  func.func @transform_3(%arg0: i32, %arg1: i32, %arg2: i32) -> (i32, i32) {
    %c0_i32 = arith.constant 0 : i32
    return %arg0, %arg1 : i32, i32
  }
}

</mosaic_0001>

<llo_original>
// kernel: tpu_custom_call.1
$region0: #{tpu_custom_call.1}
  #allocation0 [shape = 'u32[]', space=smem, size = 0x4, offset = 0x4, fixed_abs, tag = 'smem constant byte address 0x4 - core index']
  #allocation1 [shape = 'u32[144,128]{1,0:T(1,128)}', space=vmem, size = 0x12000, scoped, tag = 'internal scratch']
  #allocation2 [shape = 'f32[16,32]{1,0:T(8,128)}', space=vmem, size = 0x2000, scoped, tag = 'scratch operand']
  %s0 = inlined_call_operand.hbm [shape: bf16[16,32], index: 0, kind: input, shape index: {}]
  %s1 = inlined_call_operand.hbm [shape: bf16[32,32], index: 1, kind: input, shape index: {}]
  %s2 = inlined_call_operand.vmem [shape: f32[1,32], index: 2, kind: input, shape index: {}]
  %s3 = inlined_call_operand.hbm [shape: bf16[16,32], index: 3, kind: output, shape index: {}]
  %s4 = sld [smem:[#allocation0]]
  $region38: #{tpu_custom_call.1} parent=0
    _
  %s6 = ssub.s32 1, %s4
  %s7 = scalar_select 0, %s6, %s4
  $region1: #{tpu_custom_call.1} parent=0
    #allocation3 [shape = 'u8[4096]{0}', space=vmem, size = 0x1000, scoped, tag = 'input window, operand 0, single buffered']
    #allocation4 [shape = 's32[1]{0}', space=sflag, size = 0x4, scoped, tag = 'scoped memory for tpu_custom_call.1']
    #allocation5 [shape = 's32[1]{0}', space=sflag, size = 0x4, scoped, tag = 'scoped memory for tpu_custom_call.1']
    #allocation6 [shape = 'u8[8192]{0}', space=vmem, size = 0x2000, scoped, tag = 'input window, operand 1, single buffered']
    #allocation7 [shape = 's32[1]{0}', space=sflag, size = 0x4, scoped, tag = 'scoped memory for tpu_custom_call.1']
    #allocation8 [shape = 'u8[4096]{0}', space=vmem, size = 0x1000, scoped, tag = 'output window, operand 0, single buffered']
    %8 = vsyncpa [#allocation4], 0
    %9 = vsyncpa [#allocation7], 0
    %10 = vsyncpa [#allocation5], 0
    // Predicated region
    $region2: #{tpu_custom_call.1} parent=1 // pred_check
      _
    $region3: #{tpu_custom_call.1} parent=1 // pred_check_branch
      %12 = sbr.rel (0) target = $region5
    $region4: #{tpu_custom_call.1} parent=1 // pred_region
      %s14 = ssub.s32 128, 128
      %15 = vsyncadd [#allocation4], %s14
      %s16 = sshll.u32 [#allocation3], 4
      %s17 = int_to_ptr.vmem [resolvable:$true] %s16
      %22 = dma.hbm_to_vmem [thread:$0]  %s0, 128, %s17, [#allocation4], 64, 64, 4
    $region5: #{tpu_custom_call.1} parent=1 // pred_fallthru
      _
    // Predicated region
    $region6: #{tpu_custom_call.1} parent=1 // pred_check
      _
    $region7: #{tpu_custom_call.1} parent=1 // pred_check_branch
      %24 = sbr.rel (0) target = $region9
    $region8: #{tpu_custom_call.1} parent=1 // pred_region
      %s26 = ssub.s32 256, 256
      %27 = vsyncadd [#allocation7], %s26
      %s28 = sshll.u32 [#allocation6], 4
      %s29 = int_to_ptr.vmem [resolvable:$true] %s28
      %34 = dma.hbm_to_vmem [thread:$0]  %s1, 256, %s29, [#allocation7], 64, 64, 4
    $region9: #{tpu_custom_call.1} parent=1 // pred_fallthru
      _
    // Predicated region
    $region10: #{tpu_custom_call.1} parent=1 // pred_check
      _
    $region11: #{tpu_custom_call.1} parent=1 // pred_check_branch
      %36 = sbr.rel (0) target = $region13
    $region12: #{tpu_custom_call.1} parent=1 // pred_region
      _
    $region13: #{tpu_custom_call.1} parent=1 // pred_fallthru
      _
    // Predicated region
    $region14: #{tpu_custom_call.1} parent=1 // pred_check
      _
    $region15: #{tpu_custom_call.1} parent=1 // pred_check_branch
      %38 = sbr.rel (0) target = $region17
    $region16: #{tpu_custom_call.1} parent=1 // pred_region
      %39 = dma.done [#allocation4], 128
    $region17: #{tpu_custom_call.1} parent=1 // pred_fallthru
      _
    // Predicated region
    $region18: #{tpu_custom_call.1} parent=1 // pred_check
      _
    $region19: #{tpu_custom_call.1} parent=1 // pred_check_branch
      %41 = sbr.rel (0) target = $region21
    $region20: #{tpu_custom_call.1} parent=1 // pred_region
      %42 = dma.done [#allocation7], 256
    $region21: #{tpu_custom_call.1} parent=1 // pred_fallthru
      _
    %p44 = scmp.eq.s32.totalorder 0, 0
    // Predicated region
    $region22: #{tpu_custom_call.1} parent=1 // pred_check
      %p45 = pneg %p44
    $region23: #{tpu_custom_call.1} parent=1 // pred_check_branch
      %47 = sbr.rel (%p45) target = $region25
    $region24: #{tpu_custom_call.1} parent=1 // pred_region
      %vm48 = vcmask 261120
      %49 = vst.msk [vmem:[#allocation2] sm:$0xff] %vm48, 0.0
      %50 = vst.msk [vmem:[#allocation2 + $0x8] sm:$0xff] %vm48, 0.0
    $region25: #{tpu_custom_call.1} parent=1 // pred_fallthru
      _
    %v51 = vld [vmem:[#allocation2] sm:$0xff]
    %v52 = vld [vmem:[#allocation2 + $0x8] sm:$0xff]
    %v53 = vld [vmem:[#allocation3] sm:$0xf]
    %v54 = vld [vmem:[#allocation3 + $0x4] sm:$0xf]
    %v55 = vld [vmem:[#allocation6] sm:$0xf]
    %v56 = vld [vmem:[#allocation6 + $0x4] sm:$0xf]
    %v57 = vld [vmem:[#allocation6 + $0x8] sm:$0xf]
    %v58 = vld [vmem:[#allocation6 + $0xc] sm:$0xf]
    %v61 = vunpack.c.l.b16 %v53
    %v62 = vunpack.c.l.b16 %v54
    %v63 = vpack.c.b16 %v62, %v61
    %v68 = vunpack.c.l.b16 %v55
    %v69 = vunpack.c.l.b16 %v56
    %v70 = vunpack.c.l.b16 %v57
    %v71 = vunpack.c.l.b16 %v58
    %v72 = vpack.c.b16 %v69, %v68
    %v73 = vpack.c.b16 %v71, %v70
    %vm76 = vcmask 261120
    %v78 = vsel %vm76, %v63, 0
    %80 = vmatprep.subr.bf16.mxu0 0
    %81 = vmatpush1.bf16.msra.mxu0 %v72
    %82 = vmatprep.subr.bf16.mxu0 0
    %83 = vmatpush1.bf16.msra.mxu0 %v73
    %84 = vmatprep.subr.bf16.mxu0 0
    %85 = vmatpush1.bf16.msra.mxu0 0
    %86 = vmatprep.subr.bf16.mxu0 0
    %87 = vmatpush1.bf16.msra.mxu0 0
    %88 = vmatprep.subr.bf16.mxu0 0
    %89 = vmatpush1.bf16.msra.mxu0 0
    %90 = vmatprep.subr.bf16.mxu0 0
    %91 = vmatpush1.bf16.msra.mxu0 0
    %92 = vmatprep.subr.bf16.mxu0 0
    %93 = vmatpush1.bf16.msra.mxu0 0
    %94 = vmatprep.subr.bf16.mxu0 0
    %95 = vmatpush1.bf16.msra.mxu0 0
    %96 = vmatprep.subr.bf16.mxu0 0
    %97 = vmatpush1.bf16.msra.mxu0 0
    %98 = vmatprep.subr.bf16.mxu0 0
    %99 = vmatpush1.bf16.msra.mxu0 0
    %100 = vmatprep.subr.bf16.mxu0 0
    %101 = vmatpush1.bf16.msra.mxu0 0
    %102 = vmatprep.subr.bf16.mxu0 0
    %103 = vmatpush1.bf16.msra.mxu0 0
    %104 = vmatprep.subr.bf16.mxu0 0
    %105 = vmatpush1.bf16.msra.mxu0 0
    %106 = vmatprep.subr.bf16.mxu0 0
    %107 = vmatpush1.bf16.msra.mxu0 0
    %108 = vmatprep.subr.bf16.mxu0 0
    %109 = vmatpush1.bf16.msra.mxu0 0
    %110 = vmatprep.subr.bf16.mxu0 0
    %111 = vmatpush1.bf16.msra.mxu0 0
    %112 = vmatprep.mubr.bf16.mxu0 0
    %113 = vmatmul.mubr.bf16.gmra.mrb[0].mxu0 %v78
    %v114 = vpop.f32.mrb[0].mxu0
    %v115 = vadd.f32 0.0, %v114
    %v116 = vpop.f32.mrb[0].mxu0
    %v117 = vpop.f32.mrb[0].mxu0
    %v118 = vadd.f32 0.0, %v117
    %v119 = vpop.f32.mrb[0].mxu0
    %120 = vdwg.mxu0
    %v121 = vadd.f32 %v51, %v115
    %v122 = vadd.f32 %v52, %v118
    %123 = vst.msk [vmem:[#allocation2] sm:$0xff] %vm76, %v121
    %124 = vst.msk [vmem:[#allocation2 + $0x8] sm:$0xff] %vm76, %v122
    // Predicated region
    $region26: #{tpu_custom_call.1} parent=1 // pred_check
      %p125 = pneg %p44
    $region27: #{tpu_custom_call.1} parent=1 // pred_check_branch
      %127 = sbr.rel (%p125) target = $region29
    $region28: #{tpu_custom_call.1} parent=1 // pred_region
      %v128 = vld [vmem:[#allocation2] sm:$0xff]
      %v129 = vld [vmem:[#allocation2 + $0x8] sm:$0xff]
      %v130 = vld [vmem:[%s2] sm:$0x1]
      %v132 = vlaneseq
      %v133 = vshrl.u32 %v132, 7
      %v134 = vsub.s32 0, %v133
      %v135 = vrot.slane %v130, %v134
      %v137 = vadd.f32 %v128, %v135
      %v138 = vadd.f32 %v129, %v135
      %v139 = vpack.c.bf16 %v138, %v137
      %v141 = vunpack.c.l.b16 %v139
      %v142 = vunpack.c.h.b16 %v139
      %v143 = vpack.c.b16 %v141, %v141
      %v144 = vpack.c.b16 %v142, %v142
      %vm147 = vcmask 257024
      %148 = vst.msk [vmem:[#allocation8] sm:$0xf] %vm147, %v143
      %149 = vst.msk [vmem:[#allocation8 + $0x4] sm:$0xf] %vm147, %v144
    $region29: #{tpu_custom_call.1} parent=1 // pred_fallthru
      _
    // Predicated region
    $region30: #{tpu_custom_call.1} parent=1 // pred_check
      _
    $region31: #{tpu_custom_call.1} parent=1 // pred_check_branch
      %151 = sbr.rel (0) target = $region33
    $region32: #{tpu_custom_call.1} parent=1 // pred_region
      %s153 = ssub.s32 128, 128
      %154 = vsyncadd [#allocation5], %s153
      %s155 = sshll.u32 [#allocation8], 4
      %s156 = int_to_ptr.vmem [resolvable:$true] %s155
      %161 = dma.vmem_to_hbm [thread:$0]  %s156, 128, %s3, [#allocation5], 64, 64, 4
    $region33: #{tpu_custom_call.1} parent=1 // pred_fallthru
      _
    // Predicated region
    $region34: #{tpu_custom_call.1} parent=1 // pred_check
      _
    $region35: #{tpu_custom_call.1} parent=1 // pred_check_branch
      %163 = sbr.rel (0) target = $region37
    $region36: #{tpu_custom_call.1} parent=1 // pred_region
      %164 = dma.done [#allocation5], 128
    $region37: #{tpu_custom_call.1} parent=1 // pred_fallthru
      _
    %165 = vsyncpa [#allocation4], 1
    %166 = vsyncpa [#allocation7], 1
    %167 = vsyncpa [#allocation5], 1

</llo_original>
